<compile_context>
chip_gen: v6e
topology: v6e:2x2x1
jax: 0.10.0
libtpu: 0.0.40
codegen_flags: <defaults>
</compile_context>

<pallas_src>
import functools

import jax
import jax.numpy as jnp
from jax.experimental import pallas as pl
from jax.experimental.pallas import tpu as pltpu


def _round_up(v, m):
    return (v + m - 1) // m * m


def _is_v7x():
    try:
        kind = jax.devices()[0].device_kind.lower()
        return ("v7" in kind) or ("7x" in kind)
    except Exception:
        return False


def _vmem_capacity_bytes():
    try:
        return int(pltpu.get_tpu_info().vmem_capacity_bytes)
    except Exception:
        return 64 * 1024 * 1024   # conservative default (v7x per-TC size)


def _cornn_kernel(dt, gamma, epsilon, n_hid_p, t_chunk, reg_carry,
                  x_ref, wi_ref, bi_ref, wcat_ref, hy_out_ref, u_ref, s_ref):
    """One grid step = t_chunk recurrence timesteps for one batch block.

    x_ref:      (t_chunk, Bb, n_inp)  f32   raw input chunk (streamed)
    wi_ref:     (n_inp, H)            wdt   Wi^T (resident)
    bi_ref:     (1, H)                f32   input bias (resident)
    wcat_ref:   (2*H, H)              wdt   [w1^T ; w2^T] fused recurrent weight
    hy_out_ref: (Bb, H)               f32   hy (written on the last chunk only)
    u_ref:      (t_chunk, Bb, H)      f32   VMEM scratch for projected inputs
    s_ref:      (Bb, 2*H)             f32   [hy | hz] state, persists across chunks

    NOTE: correctness relies on the time-chunk axis being the innermost grid
    axis (per batch block) and on the chunk==0 state reset; do not reorder the
    grid or move "parallel" onto the time axis.
    """
    chunk = pl.program_id(1)
    is_last = chunk == pl.num_programs(1) - 1
    bb = x_ref.shape[1]

    @pl.when(chunk == 0)
    def _():
        s_ref[...] = jnp.zeros_like(s_ref)

    # Small, lane-dense, chunk-invariant operands (loaded once per chunk).
    w_in = wi_ref[...]                                    # (n_inp, H)
    w_cat = wcat_ref[...]                                 # (2H, H)
    bi = jnp.broadcast_to(bi_ref[...], (bb, n_hid_p))     # hoisted broadcast

    # ---- projection prologue: u[i] = x[i] @ Wi^T + bi for the whole chunk ----
    # No state dependence -> stays off the serial recurrence critical path; the
    # recurrence loop below only does a (non-dependent) VMEM load of u_ref[i].
    def proj(i, carry):
        xi = x_ref[i].astype(w_in.dtype)
        u_ref[i] = jnp.dot(xi, w_in, preferred_element_type=jnp.float32) + bi
        return carry

    jax.lax.fori_loop(0, t_chunk, proj, 0, unroll=True)

    if reg_carry:
        # ---- register-carried state: no VMEM round-trip per timestep ----
        def step(i, carry):
            hy, hz = carry
            s = jnp.concatenate([hy, hz], axis=-1).astype(w_cat.dtype)
            # hy @ w1^T + hz @ w2^T as ONE fused MXU matmul (f32 accumulate).
            pre = jnp.dot(s, w_cat, preferred_element_type=jnp.float32) + u_ref[i]
            hz = hz + dt * (jnp.tanh(pre) - gamma * hy - epsilon * hz)
            hy = hy + dt * hz
            return (hy, hz)

        hy0 = s_ref[:, :n_hid_p]
        hz0 = s_ref[:, n_hid_p:]
        hy_f, hz_f = jax.lax.fori_loop(0, t_chunk, step, (hy0, hz0),
                                       unroll=True)

        # Spill the state back to VMEM only if another chunk will consume it.
        @pl.when(jnp.logical_not(is_last))
        def _():
            s_ref[:, :n_hid_p] = hy_f
            s_ref[:, n_hid_p:] = hz_f

        @pl.when(is_last)
        def _():
            hy_out_ref[...] = hy_f
    else:
        # ---- fallback: state kept in VMEM scratch (large batch blocks) ----
        def step(i, carry):
            s = s_ref[...]
            hy = s[:, :n_hid_p]
            hz = s[:, n_hid_p:]
            pre = jnp.dot(s.astype(w_cat.dtype), w_cat,
                          preferred_element_type=jnp.float32) + u_ref[i]
            hz_new = hz + dt * (jnp.tanh(pre) - gamma * hy - epsilon * hz)
            hy_new = hy + dt * hz_new
            s_ref[:, :n_hid_p] = hy_new
            s_ref[:, n_hid_p:] = hz_new
            return carry

        jax.lax.fori_loop(0, t_chunk, step, 0, unroll=True)

        @pl.when(is_last)
        def _():
            hy_out_ref[...] = s_ref[:, :n_hid_p]


def cornn_forward(x, params, *, dt, gamma, epsilon,
                  t_chunk=None, batch_block=None,
                  weight_dtype=jnp.bfloat16, state_in_registers=None):
    """x: (T, B, n_inp) float32.  Returns readout output (B, n_out) float32."""
    T, B, n_inp = x.shape
    wi, bi, w1, w2, wr, br = params
    n_hid = wi.shape[0]

    f32 = jnp.float32
    n_hid_p = _round_up(n_hid, 128)     # lane-dense hidden dim
    b_p = _round_up(B, 8)               # sublane-aligned batch

    # --- batch block: full batch per grid step (best MXU M-fill on v5e/v6e);
    # split in two on v7x for large batches so the "parallel" axis can actually
    # be sharded across its two TensorCores. ---
    if batch_block is None:
        batch_block = b_p
        if _is_v7x() and b_p >= 256 and (b_p // 2) % 8 == 0:
            batch_block = b_p // 2
    assert b_p % batch_block == 0 and batch_block % 8 == 0

    # --- time chunk: biggest divisor of T (up to 32) whose per-chunk VMEM
    # footprint (projected-U scratch + double-buffered x chunk) stays modest. ---
    if t_chunk is None:
        budget = 8 << 20
        t_chunk = 1
        for c in (32, 16, 8, 4, 2, 1):
            if T % c == 0 and c * batch_block * (n_hid_p + 2 * n_inp) * 4 <= budget:
                t_chunk = c
                break
    assert T % t_chunk == 0

    # Register-carry the state only when it fits comfortably in the vreg file
    # (~256 KiB); otherwise fall back to the VMEM-scratch state path.
    if state_in_registers is None:
        state_in_registers = batch_block * 2 * n_hid_p * 4 <= 128 * 1024

    # --- weight prep: pad, transpose, fuse (done once in XLA) ---
    wi_t = (jnp.zeros((n_inp, n_hid_p), f32)
            .at[:, :n_hid].set(wi.T.astype(f32)).astype(weight_dtype))
    bi_p = jnp.zeros((1, n_hid_p), f32).at[0, :n_hid].set(bi.astype(f32))
    w_cat = jnp.zeros((2 * n_hid_p, n_hid_p), f32)
    w_cat = w_cat.at[:n_hid, :n_hid].set(w1.T.astype(f32))
    w_cat = w_cat.at[n_hid_p:n_hid_p + n_hid, :n_hid].set(w2.T.astype(f32))
    w_cat = w_cat.astype(weight_dtype)   # bf16: 2x MXU width, half the VMEM bytes

    # --- batch padding of the streamed input (hidden padding happens via Wi) ---
    x_f = x.astype(f32)
    if b_p != B:
        x_f = jnp.zeros((T, b_p, n_inp), f32).at[:, :B, :].set(x_f)

    # --- explicit VMEM budget (fixes v5e 16 MiB scoped default, respects v7x 64 MiB) ---
    wbytes = jnp.dtype(weight_dtype).itemsize
    est = (2 * t_chunk * batch_block * n_inp * 4          # x chunk, double-buffered
           + 2 * n_inp * n_hid_p * wbytes                 # Wi^T
           + 2 * n_hid_p * 4                              # bias
           + 2 * 2 * n_hid_p * n_hid_p * wbytes           # W_cat
           + t_chunk * batch_block * n_hid_p * 4          # U scratch
           + batch_block * 2 * n_hid_p * 4                # state scratch
           + 2 * batch_block * n_hid_p * 4)               # output block
    vmem_cap = _vmem_capacity_bytes()
    vmem_limit = int(min(int(0.9 * vmem_cap), max(32 << 20, 4 * est)))

    kernel = functools.partial(_cornn_kernel, float(dt), float(gamma),
                               float(epsilon), n_hid_p, t_chunk,
                               bool(state_in_registers))

    n_batch_blocks = b_p // batch_block
    n_time_chunks = T // t_chunk

    hy_final = pl.pallas_call(
        kernel,
        out_shape=jax.ShapeDtypeStruct((b_p, n_hid_p), f32),
        grid_spec=pltpu.PrefetchScalarGridSpec(
            num_scalar_prefetch=0,
            grid=(n_batch_blocks, n_time_chunks),
            in_specs=[
                # Raw x chunk streamed along the time-chunk axis (tiny vs. U).
                pl.BlockSpec((t_chunk, batch_block, n_inp),
                             lambda b, c: (c, b, 0)),
                # Resident weights / bias: constant block index.
                pl.BlockSpec((n_inp, n_hid_p), lambda b, c: (0, 0)),
                pl.BlockSpec((1, n_hid_p), lambda b, c: (0, 0)),
                pl.BlockSpec((2 * n_hid_p, n_hid_p), lambda b, c: (0, 0)),
            ],
            out_specs=pl.BlockSpec((batch_block, n_hid_p),
                                   lambda b, c: (b, 0)),
            scratch_shapes=[
                pltpu.VMEM((t_chunk, batch_block, n_hid_p), f32),   # projected U
                pltpu.VMEM((batch_block, 2 * n_hid_p), f32),        # [hy | hz]
            ],
        ),
        compiler_params=pltpu.CompilerParams(
            # Batch blocks are independent (megacore-splittable on v7x);
            # the recurrence over time chunks is inherently sequential.
            dimension_semantics=("parallel", "arbitrary"),
            vmem_limit_bytes=vmem_limit),
    )(x_f, wi_t, bi_p, w_cat)

    # --- readout: runs once, trivially efficient in plain XLA ---
    hy = hy_final[:B, :n_hid]
    return jnp.dot(hy, wr.T.astype(f32), preferred_element_type=f32) + br.astype(f32)


def cornn_reference(x, params, *, dt, gamma, epsilon):
    """Plain-JAX reference mirroring the PyTorch forward."""
    wi, bi, w1, w2, wr, br = params
    T, B, _ = x.shape
    n_hid = wi.shape[0]
    hy = jnp.zeros((B, n_hid), jnp.float32)
    hz = jnp.zeros((B, n_hid), jnp.float32)
    for t in range(T):
        pre = hy @ w1.T + hz @ w2.T + x[t] @ wi.T + bi
        hz = hz + dt * (jnp.tanh(pre) - gamma * hy - epsilon * hz)
        hy = hy + dt * hz
    return hy @ wr.T + br


def init_params(key, n_inp, n_hid, n_out):
    """Deterministic init mimicking nn.Linear defaults."""
    ks = jax.random.split(key, 6)

    def lin_w(k, fan_out, fan_in):
        bound = 1.0 / jnp.sqrt(fan_in)
        return jax.random.uniform(k, (fan_out, fan_in), jnp.float32, -bound, bound)

    def lin_b(k, fan_out, fan_in):
        bound = 1.0 / jnp.sqrt(fan_in)
        return jax.random.uniform(k, (fan_out,), jnp.float32, -bound, bound)

    wi = lin_w(ks[0], n_hid, n_inp)        # i2h.weight
    bi = lin_b(ks[1], n_hid, n_inp)        # i2h.bias
    w1 = lin_w(ks[2], n_hid, n_hid)        # h2h1.weight (no bias)
    w2 = lin_w(ks[3], n_hid, n_hid)        # h2h2.weight (no bias)
    wr = lin_w(ks[4], n_out, n_hid)        # readout.weight
    br = lin_b(ks[5], n_out, n_hid)        # readout.bias
    return (wi, bi, w1, w2, wr, br)


if __name__ == "__main__":
    # Small shapes consistent with the module's forward: x is (seq, batch, n_inp).
    T, B, n_inp, n_hid, n_out = 8, 8, 16, 32, 10
    dt, gamma, epsilon = 0.05, 1.3, 12.7

    key = jax.random.PRNGKey(0)
    kx, kp = jax.random.split(key)
    x = jax.random.normal(kx, (T, B, n_inp), jnp.float32)
    params = init_params(kp, n_inp, n_hid, n_out)

    ref = cornn_reference(x, params, dt=dt, gamma=gamma, epsilon=epsilon)

    # f32 weights, t_chunk=4: multi-chunk carry through the register-state path.
    out_f32 = jax.block_until_ready(
        cornn_forward(x, params, dt=dt, gamma=gamma, epsilon=epsilon,
                      t_chunk=4, weight_dtype=jnp.float32))
    assert out_f32.shape == (B, n_out)
    assert jnp.allclose(out_f32, ref, atol=1e-4, rtol=1e-4), "f32 (reg-carry) mismatch"

    # f32 weights, forced VMEM-scratch state path (fallback for huge batch blocks).
    out_scr = jax.block_until_ready(
        cornn_forward(x, params, dt=dt, gamma=gamma, epsilon=epsilon,
                      t_chunk=2, weight_dtype=jnp.float32,
                      state_in_registers=False))
    assert jnp.allclose(out_scr, ref, atol=1e-4, rtol=1e-4), "f32 (scratch) mismatch"

    # Fast path: bf16 weights + fused in-kernel projection (state/accum stay f32).
    out_bf16 = jax.block_until_ready(
        cornn_forward(x, params, dt=dt, gamma=gamma, epsilon=epsilon,
                      weight_dtype=jnp.bfloat16))
    assert out_bf16.shape == (B, n_out)
    assert jnp.allclose(out_bf16, ref, atol=2e-2, rtol=2e-2), "bf16 mismatch vs reference"

    print("KERNEL_OK")
</pallas_src>

<mosaic_0001>
module attributes {stable_mosaic.version = 11 : i64} {
  func.func @_cornn_kernel(%arg0: i32, %arg1: i32, %arg2: memref<4x8x16xf32, #tpu.memory_space<vmem>>, %arg3: memref<16x128xf32, #tpu.memory_space<vmem>>, %arg4: memref<1x128xf32, #tpu.memory_space<vmem>>, %arg5: memref<256x128xf32, #tpu.memory_space<vmem>>, %arg6: memref<8x128xf32, #tpu.memory_space<vmem>>, %arg7: memref<4x8x128xf32, #tpu.memory_space<vmem>>, %arg8: memref<8x256xf32, #tpu.memory_space<vmem>>) attributes {dimension_semantics = [#tpu.dimension_semantics<parallel>, #tpu.dimension_semantics<arbitrary>], iteration_bounds = array<i64: 1, 2>, scalar_prefetch = 0 : i64, scratch_operands = 2 : i64, tpu.core_type = #tpu.core_type<tc>, window_params = [{transform_indices = @transform_0, window_bounds = array<i64: 4, 8, 16>}, {pipeline_mode = #tpu.pipeline_mode<synchronous>, transform_indices = @transform_1, window_bounds = array<i64: 16, 128>}, {pipeline_mode = #tpu.pipeline_mode<synchronous>, transform_indices = @transform_2, window_bounds = array<i64: 1, 128>}, {pipeline_mode = #tpu.pipeline_mode<synchronous>, transform_indices = @transform_3, window_bounds = array<i64: 256, 128>}, {transform_indices = @transform_4, window_bounds = array<i64: 8, 128>}]} {
    %c1_i32 = arith.constant 1 : i32
    %0 = arith.cmpi eq, %arg1, %c1_i32 : i32
    %c0_i32 = arith.constant 0 : i32
    %1 = arith.cmpi eq, %arg1, %c0_i32 : i32
    %2 = arith.extui %1 : i1 to i32
    %c0_i32_0 = arith.constant 0 : i32
    %3 = arith.cmpi ne, %2, %c0_i32_0 : i32
    scf.if %3 {
      %cst_65 = arith.constant 0.000000e+00 : f32
      %128 = vector.broadcast %cst_65 : f32 to vector<8x256xf32>
      %c0_66 = arith.constant 0 : index
      %c0_67 = arith.constant 0 : index
      %129 = vector.load %arg8[%c0_66, %c0_67] : memref<8x256xf32, #tpu.memory_space<vmem>>, vector<8x256xf32>
      tpu.vector_store %arg8[%c0_66, %c0_67], %128 {strides = array<i32>} : memref<8x256xf32, #tpu.memory_space<vmem>>, vector<8x256xf32>,
    } else {
    }
    %c0 = arith.constant 0 : index
    %c0_1 = arith.constant 0 : index
    %4 = vector.load %arg3[%c0, %c0_1] : memref<16x128xf32, #tpu.memory_space<vmem>>, vector<16x128xf32>
    %c0_2 = arith.constant 0 : index
    %c0_3 = arith.constant 0 : index
    %5 = vector.load %arg5[%c0_2, %c0_3] : memref<256x128xf32, #tpu.memory_space<vmem>>, vector<256x128xf32>
    %c0_4 = arith.constant 0 : index
    %c0_5 = arith.constant 0 : index
    %6 = vector.load %arg4[%c0_4, %c0_5] : memref<1x128xf32, #tpu.memory_space<vmem>>, vector<1x128xf32>
    %7 = vector.shape_cast %6 : vector<1x128xf32> to vector<1x128xf32>
    %8 = vector.broadcast %7 : vector<1x128xf32> to vector<8x128xf32>
    %c0_i32_6 = arith.constant 0 : i32
    %9 = arith.index_cast %c0_i32_6 : i32 to index
    %c0_7 = arith.constant 0 : index
    %c0_8 = arith.constant 0 : index
    %10 = vector.load %arg2[%9, %c0_7, %c0_8] : memref<4x8x16xf32, #tpu.memory_space<vmem>>, vector<1x8x16xf32>
    %11 = vector.shape_cast %10 : vector<1x8x16xf32> to vector<8x16xf32>
    %cst = arith.constant dense<0.000000e+00> : vector<8x128xf32>
    %12 = tpu.matmul %11, %4, %cst {dimension_numbers = #tpu.dot_dimension_numbers<[1], [0], [0], [1], [0, 0, 1, 1], [], []>} : vector<8x16xf32>, vector<16x128xf32>, vector<8x128xf32> -> vector<8x128xf32>
    %13 = arith.addf %12, %8 : vector<8x128xf32>
    %14 = arith.index_cast %c0_i32_6 : i32 to index
    %c0_9 = arith.constant 0 : index
    %c0_10 = arith.constant 0 : index
    %15 = vector.load %arg7[%14, %c0_9, %c0_10] : memref<4x8x128xf32, #tpu.memory_space<vmem>>, vector<1x8x128xf32>
    %16 = vector.shape_cast %15 : vector<1x8x128xf32> to vector<8x128xf32>
    %17 = vector.shape_cast %13 : vector<8x128xf32> to vector<1x8x128xf32>
    tpu.vector_store %arg7[%14, %c0_9, %c0_10], %17 {strides = array<i32>} : memref<4x8x128xf32, #tpu.memory_space<vmem>>, vector<1x8x128xf32>,
    %c1_i32_11 = arith.constant 1 : i32
    %18 = arith.index_cast %c1_i32_11 : i32 to index
    %c0_12 = arith.constant 0 : index
    %c0_13 = arith.constant 0 : index
    %19 = vector.load %arg2[%18, %c0_12, %c0_13] : memref<4x8x16xf32, #tpu.memory_space<vmem>>, vector<1x8x16xf32>
    %20 = vector.shape_cast %19 : vector<1x8x16xf32> to vector<8x16xf32>
    %cst_14 = arith.constant dense<0.000000e+00> : vector<8x128xf32>
    %21 = tpu.matmul %20, %4, %cst_14 {dimension_numbers = #tpu.dot_dimension_numbers<[1], [0], [0], [1], [0, 0, 1, 1], [], []>} : vector<8x16xf32>, vector<16x128xf32>, vector<8x128xf32> -> vector<8x128xf32>
    %22 = arith.addf %21, %8 : vector<8x128xf32>
    %23 = arith.index_cast %c1_i32_11 : i32 to index
    %c0_15 = arith.constant 0 : index
    %c0_16 = arith.constant 0 : index
    %24 = vector.load %arg7[%23, %c0_15, %c0_16] : memref<4x8x128xf32, #tpu.memory_space<vmem>>, vector<1x8x128xf32>
    %25 = vector.shape_cast %24 : vector<1x8x128xf32> to vector<8x128xf32>
    %26 = vector.shape_cast %22 : vector<8x128xf32> to vector<1x8x128xf32>
    tpu.vector_store %arg7[%23, %c0_15, %c0_16], %26 {strides = array<i32>} : memref<4x8x128xf32, #tpu.memory_space<vmem>>, vector<1x8x128xf32>,
    %c2_i32 = arith.constant 2 : i32
    %27 = arith.index_cast %c2_i32 : i32 to index
    %c0_17 = arith.constant 0 : index
    %c0_18 = arith.constant 0 : index
    %28 = vector.load %arg2[%27, %c0_17, %c0_18] : memref<4x8x16xf32, #tpu.memory_space<vmem>>, vector<1x8x16xf32>
    %29 = vector.shape_cast %28 : vector<1x8x16xf32> to vector<8x16xf32>
    %cst_19 = arith.constant dense<0.000000e+00> : vector<8x128xf32>
    %30 = tpu.matmul %29, %4, %cst_19 {dimension_numbers = #tpu.dot_dimension_numbers<[1], [0], [0], [1], [0, 0, 1, 1], [], []>} : vector<8x16xf32>, vector<16x128xf32>, vector<8x128xf32> -> vector<8x128xf32>
    %31 = arith.addf %30, %8 : vector<8x128xf32>
    %32 = arith.index_cast %c2_i32 : i32 to index
    %c0_20 = arith.constant 0 : index
    %c0_21 = arith.constant 0 : index
    %33 = vector.load %arg7[%32, %c0_20, %c0_21] : memref<4x8x128xf32, #tpu.memory_space<vmem>>, vector<1x8x128xf32>
    %34 = vector.shape_cast %33 : vector<1x8x128xf32> to vector<8x128xf32>
    %35 = vector.shape_cast %31 : vector<8x128xf32> to vector<1x8x128xf32>
    tpu.vector_store %arg7[%32, %c0_20, %c0_21], %35 {strides = array<i32>} : memref<4x8x128xf32, #tpu.memory_space<vmem>>, vector<1x8x128xf32>,
    %c3_i32 = arith.constant 3 : i32
    %36 = arith.index_cast %c3_i32 : i32 to index
    %c0_22 = arith.constant 0 : index
    %c0_23 = arith.constant 0 : index
    %37 = vector.load %arg2[%36, %c0_22, %c0_23] : memref<4x8x16xf32, #tpu.memory_space<vmem>>, vector<1x8x16xf32>
    %38 = vector.shape_cast %37 : vector<1x8x16xf32> to vector<8x16xf32>
    %cst_24 = arith.constant dense<0.000000e+00> : vector<8x128xf32>
    %39 = tpu.matmul %38, %4, %cst_24 {dimension_numbers = #tpu.dot_dimension_numbers<[1], [0], [0], [1], [0, 0, 1, 1], [], []>} : vector<8x16xf32>, vector<16x128xf32>, vector<8x128xf32> -> vector<8x128xf32>
    %40 = arith.addf %39, %8 : vector<8x128xf32>
    %41 = arith.index_cast %c3_i32 : i32 to index
    %c0_25 = arith.constant 0 : index
    %c0_26 = arith.constant 0 : index
    %42 = vector.load %arg7[%41, %c0_25, %c0_26] : memref<4x8x128xf32, #tpu.memory_space<vmem>>, vector<1x8x128xf32>
    %43 = vector.shape_cast %42 : vector<1x8x128xf32> to vector<8x128xf32>
    %44 = vector.shape_cast %40 : vector<8x128xf32> to vector<1x8x128xf32>
    tpu.vector_store %arg7[%41, %c0_25, %c0_26], %44 {strides = array<i32>} : memref<4x8x128xf32, #tpu.memory_space<vmem>>, vector<1x8x128xf32>,
    %c4_i32 = arith.constant 4 : i32
    %c0_27 = arith.constant 0 : index
    %c0_28 = arith.constant 0 : index
    %45 = vector.load %arg8[%c0_27, %c0_28] : memref<8x256xf32, #tpu.memory_space<vmem>>, vector<8x128xf32>
    %c0_29 = arith.constant 0 : index
    %c128 = arith.constant 128 : index
    %46 = vector.load %arg8[%c0_29, %c128] : memref<8x256xf32, #tpu.memory_space<vmem>>, vector<8x128xf32>
    %c0_i32_30 = arith.constant 0 : i32
    %47 = tpu.concatenate %45, %46 in 1 : vector<8x128xf32>, vector<8x128xf32> -> vector<8x256xf32>
    %cst_31 = arith.constant dense<0.000000e+00> : vector<8x128xf32>
    %48 = tpu.matmul %47, %5, %cst_31 {dimension_numbers = #tpu.dot_dimension_numbers<[1], [0], [0], [1], [0, 0, 1, 1], [], []>} : vector<8x256xf32>, vector<256x128xf32>, vector<8x128xf32> -> vector<8x128xf32>
    %49 = arith.index_cast %c0_i32_30 : i32 to index
    %c0_32 = arith.constant 0 : index
    %c0_33 = arith.constant 0 : index
    %50 = vector.load %arg7[%49, %c0_32, %c0_33] : memref<4x8x128xf32, #tpu.memory_space<vmem>>, vector<1x8x128xf32>
    %51 = vector.shape_cast %50 : vector<1x8x128xf32> to vector<8x128xf32>
    %52 = arith.addf %48, %51 : vector<8x128xf32>
    %53 = math.tanh %52 : vector<8x128xf32>
    %cst_34 = arith.constant 1.300000e+00 : f32
    %54 = vector.broadcast %cst_34 : f32 to vector<8x128xf32>
    %55 = arith.mulf %54, %45 : vector<8x128xf32>
    %56 = arith.subf %53, %55 : vector<8x128xf32>
    %cst_35 = arith.constant 1.270000e+01 : f32
    %57 = vector.broadcast %cst_35 : f32 to vector<8x128xf32>
    %58 = arith.mulf %57, %46 : vector<8x128xf32>
    %59 = arith.subf %56, %58 : vector<8x128xf32>
    %cst_36 = arith.constant 5.000000e-02 : f32
    %60 = vector.broadcast %cst_36 : f32 to vector<8x128xf32>
    %61 = arith.mulf %60, %59 : vector<8x128xf32>
    %62 = arith.addf %46, %61 : vector<8x128xf32>
    %cst_37 = arith.constant 5.000000e-02 : f32
    %63 = vector.broadcast %cst_37 : f32 to vector<8x128xf32>
    %64 = arith.mulf %63, %62 : vector<8x128xf32>
    %65 = arith.addf %45, %64 : vector<8x128xf32>
    %c1_i32_38 = arith.constant 1 : i32
    %66 = tpu.concatenate %65, %62 in 1 : vector<8x128xf32>, vector<8x128xf32> -> vector<8x256xf32>
    %cst_39 = arith.constant dense<0.000000e+00> : vector<8x128xf32>
    %67 = tpu.matmul %66, %5, %cst_39 {dimension_numbers = #tpu.dot_dimension_numbers<[1], [0], [0], [1], [0, 0, 1, 1], [], []>} : vector<8x256xf32>, vector<256x128xf32>, vector<8x128xf32> -> vector<8x128xf32>
    %68 = arith.index_cast %c1_i32_38 : i32 to index
    %c0_40 = arith.constant 0 : index
    %c0_41 = arith.constant 0 : index
    %69 = vector.load %arg7[%68, %c0_40, %c0_41] : memref<4x8x128xf32, #tpu.memory_space<vmem>>, vector<1x8x128xf32>
    %70 = vector.shape_cast %69 : vector<1x8x128xf32> to vector<8x128xf32>
    %71 = arith.addf %67, %70 : vector<8x128xf32>
    %72 = math.tanh %71 : vector<8x128xf32>
    %cst_42 = arith.constant 1.300000e+00 : f32
    %73 = vector.broadcast %cst_42 : f32 to vector<8x128xf32>
    %74 = arith.mulf %73, %65 : vector<8x128xf32>
    %75 = arith.subf %72, %74 : vector<8x128xf32>
    %cst_43 = arith.constant 1.270000e+01 : f32
    %76 = vector.broadcast %cst_43 : f32 to vector<8x128xf32>
    %77 = arith.mulf %76, %62 : vector<8x128xf32>
    %78 = arith.subf %75, %77 : vector<8x128xf32>
    %cst_44 = arith.constant 5.000000e-02 : f32
    %79 = vector.broadcast %cst_44 : f32 to vector<8x128xf32>
    %80 = arith.mulf %79, %78 : vector<8x128xf32>
    %81 = arith.addf %62, %80 : vector<8x128xf32>
    %cst_45 = arith.constant 5.000000e-02 : f32
    %82 = vector.broadcast %cst_45 : f32 to vector<8x128xf32>
    %83 = arith.mulf %82, %81 : vector<8x128xf32>
    %84 = arith.addf %65, %83 : vector<8x128xf32>
    %c2_i32_46 = arith.constant 2 : i32
    %85 = tpu.concatenate %84, %81 in 1 : vector<8x128xf32>, vector<8x128xf32> -> vector<8x256xf32>
    %cst_47 = arith.constant dense<0.000000e+00> : vector<8x128xf32>
    %86 = tpu.matmul %85, %5, %cst_47 {dimension_numbers = #tpu.dot_dimension_numbers<[1], [0], [0], [1], [0, 0, 1, 1], [], []>} : vector<8x256xf32>, vector<256x128xf32>, vector<8x128xf32> -> vector<8x128xf32>
    %87 = arith.index_cast %c2_i32_46 : i32 to index
    %c0_48 = arith.constant 0 : index
    %c0_49 = arith.constant 0 : index
    %88 = vector.load %arg7[%87, %c0_48, %c0_49] : memref<4x8x128xf32, #tpu.memory_space<vmem>>, vector<1x8x128xf32>
    %89 = vector.shape_cast %88 : vector<1x8x128xf32> to vector<8x128xf32>
    %90 = arith.addf %86, %89 : vector<8x128xf32>
    %91 = math.tanh %90 : vector<8x128xf32>
    %cst_50 = arith.constant 1.300000e+00 : f32
    %92 = vector.broadcast %cst_50 : f32 to vector<8x128xf32>
    %93 = arith.mulf %92, %84 : vector<8x128xf32>
    %94 = arith.subf %91, %93 : vector<8x128xf32>
    %cst_51 = arith.constant 1.270000e+01 : f32
    %95 = vector.broadcast %cst_51 : f32 to vector<8x128xf32>
    %96 = arith.mulf %95, %81 : vector<8x128xf32>
    %97 = arith.subf %94, %96 : vector<8x128xf32>
    %cst_52 = arith.constant 5.000000e-02 : f32
    %98 = vector.broadcast %cst_52 : f32 to vector<8x128xf32>
    %99 = arith.mulf %98, %97 : vector<8x128xf32>
    %100 = arith.addf %81, %99 : vector<8x128xf32>
    %cst_53 = arith.constant 5.000000e-02 : f32
    %101 = vector.broadcast %cst_53 : f32 to vector<8x128xf32>
    %102 = arith.mulf %101, %100 : vector<8x128xf32>
    %103 = arith.addf %84, %102 : vector<8x128xf32>
    %c3_i32_54 = arith.constant 3 : i32
    %104 = tpu.concatenate %103, %100 in 1 : vector<8x128xf32>, vector<8x128xf32> -> vector<8x256xf32>
    %cst_55 = arith.constant dense<0.000000e+00> : vector<8x128xf32>
    %105 = tpu.matmul %104, %5, %cst_55 {dimension_numbers = #tpu.dot_dimension_numbers<[1], [0], [0], [1], [0, 0, 1, 1], [], []>} : vector<8x256xf32>, vector<256x128xf32>, vector<8x128xf32> -> vector<8x128xf32>
    %106 = arith.index_cast %c3_i32_54 : i32 to index
    %c0_56 = arith.constant 0 : index
    %c0_57 = arith.constant 0 : index
    %107 = vector.load %arg7[%106, %c0_56, %c0_57] : memref<4x8x128xf32, #tpu.memory_space<vmem>>, vector<1x8x128xf32>
    %108 = vector.shape_cast %107 : vector<1x8x128xf32> to vector<8x128xf32>
    %109 = arith.addf %105, %108 : vector<8x128xf32>
    %110 = math.tanh %109 : vector<8x128xf32>
    %cst_58 = arith.constant 1.300000e+00 : f32
    %111 = vector.broadcast %cst_58 : f32 to vector<8x128xf32>
    %112 = arith.mulf %111, %103 : vector<8x128xf32>
    %113 = arith.subf %110, %112 : vector<8x128xf32>
    %cst_59 = arith.constant 1.270000e+01 : f32
    %114 = vector.broadcast %cst_59 : f32 to vector<8x128xf32>
    %115 = arith.mulf %114, %100 : vector<8x128xf32>
    %116 = arith.subf %113, %115 : vector<8x128xf32>
    %cst_60 = arith.constant 5.000000e-02 : f32
    %117 = vector.broadcast %cst_60 : f32 to vector<8x128xf32>
    %118 = arith.mulf %117, %116 : vector<8x128xf32>
    %119 = arith.addf %100, %118 : vector<8x128xf32>
    %cst_61 = arith.constant 5.000000e-02 : f32
    %120 = vector.broadcast %cst_61 : f32 to vector<8x128xf32>
    %121 = arith.mulf %120, %119 : vector<8x128xf32>
    %122 = arith.addf %103, %121 : vector<8x128xf32>
    %c4_i32_62 = arith.constant 4 : i32
    %true = arith.constant true
    %123 = arith.xori %0, %true : i1
    %124 = arith.extui %123 : i1 to i32
    %c0_i32_63 = arith.constant 0 : i32
    %125 = arith.cmpi ne, %124, %c0_i32_63 : i32
    scf.if %125 {
      %c0_65 = arith.constant 0 : index
      %c0_66 = arith.constant 0 : index
      %128 = vector.load %arg8[%c0_65, %c0_66] : memref<8x256xf32, #tpu.memory_space<vmem>>, vector<8x128xf32>
      tpu.vector_store %arg8[%c0_65, %c0_66], %122 {strides = array<i32>} : memref<8x256xf32, #tpu.memory_space<vmem>>, vector<8x128xf32>,
      %c0_67 = arith.constant 0 : index
      %c128_68 = arith.constant 128 : index
      %129 = vector.load %arg8[%c0_67, %c128_68] : memref<8x256xf32, #tpu.memory_space<vmem>>, vector<8x128xf32>
      tpu.vector_store %arg8[%c0_67, %c128_68], %119 {strides = array<i32>} : memref<8x256xf32, #tpu.memory_space<vmem>>, vector<8x128xf32>,
    } else {
    }
    %126 = arith.extui %0 : i1 to i32
    %c0_i32_64 = arith.constant 0 : i32
    %127 = arith.cmpi ne, %126, %c0_i32_64 : i32
    scf.if %127 {
      %c0_65 = arith.constant 0 : index
      %c0_66 = arith.constant 0 : index
      %128 = vector.load %arg6[%c0_65, %c0_66] : memref<8x128xf32, #tpu.memory_space<vmem>>, vector<8x128xf32>
      tpu.vector_store %arg6[%c0_65, %c0_66], %122 {strides = array<i32>} : memref<8x128xf32, #tpu.memory_space<vmem>>, vector<8x128xf32>,
    } else {
    }
    return
  }
  func.func @transform_0(%arg0: i32, %arg1: i32) -> (i32, i32, i32) {
    %c0_i32 = arith.constant 0 : i32
    %c0_i32_0 = arith.constant 0 : i32
    return %arg1, %arg0, %c0_i32 : i32, i32, i32
  }
  func.func @transform_1(%arg0: i32, %arg1: i32) -> (i32, i32) {
    %c0_i32 = arith.constant 0 : i32
    %c0_i32_0 = arith.constant 0 : i32
    %c0_i32_1 = arith.constant 0 : i32
    return %c0_i32, %c0_i32_0 : i32, i32
  }
  func.func @transform_2(%arg0: i32, %arg1: i32) -> (i32, i32) {
    %c0_i32 = arith.constant 0 : i32
    %c0_i32_0 = arith.constant 0 : i32
    %c0_i32_1 = arith.constant 0 : i32
    return %c0_i32, %c0_i32_0 : i32, i32
  }
  func.func @transform_3(%arg0: i32, %arg1: i32) -> (i32, i32) {
    %c0_i32 = arith.constant 0 : i32
    %c0_i32_0 = arith.constant 0 : i32
    %c0_i32_1 = arith.constant 0 : i32
    return %c0_i32, %c0_i32_0 : i32, i32
  }
  func.func @transform_4(%arg0: i32, %arg1: i32) -> (i32, i32) {
    %c0_i32 = arith.constant 0 : i32
    %c0_i32_0 = arith.constant 0 : i32
    return %arg0, %c0_i32 : i32, i32
  }
}

</mosaic_0001>

<llo_original>
// kernel: tpu_custom_call.1
$region0: #{tpu_custom_call.1}
  #allocation0 [shape = 'u32[]', space=smem, size = 0x4, offset = 0x4, fixed_abs, tag = 'smem constant byte address 0x4 - core index']
  #allocation1 [shape = 'u32[144,128]{1,0:T(1,128)}', space=vmem, size = 0x12000, scoped, tag = 'internal scratch']
  #allocation2 [shape = 'f32[4,8,128]{2,1,0:T(8,128)}', space=vmem, size = 0x4000, scoped, tag = 'scratch operand']
  #allocation3 [shape = 'f32[8,256]{1,0:T(8,128)}', space=vmem, size = 0x2000, scoped, tag = 'scratch operand']
  %s0 = inlined_call_operand.hbm [shape: f32[8,8,16], index: 0, kind: input, shape index: {}]
  %s1 = inlined_call_operand.hbm [shape: f32[16,128], index: 1, kind: input, shape index: {}]
  %s2 = inlined_call_operand.vmem [shape: f32[1,128], index: 2, kind: input, shape index: {}]
  %s3 = inlined_call_operand.hbm [shape: f32[256,128], index: 3, kind: input, shape index: {}]
  %s4 = inlined_call_operand.hbm [shape: f32[8,128], index: 4, kind: output, shape index: {}]
  %s5 = sld [smem:[#allocation0]]
  $region73: #{tpu_custom_call.1} parent=0
    _
  %s7 = ssub.s32 1, %s5
  %s8 = scalar_select 0, %s7, %s5
  $region1: #{tpu_custom_call.1} parent=0
    #allocation4 [shape = 'u8[32768]{0}', space=vmem, size = 0x8000, scoped, tag = 'input window, operand 0']
    #allocation5 [shape = 's32[2]{0}', space=sflag, size = 0x8, scoped, tag = 'scoped memory for tpu_custom_call.1']
    #allocation6 [shape = 's32[2]{0}', space=sflag, size = 0x8, scoped, tag = 'scoped memory for tpu_custom_call.1']
    #allocation7 [shape = 'u8[8192]{0}', space=vmem, size = 0x2000, scoped, tag = 'input window, operand 1, single buffered']
    #allocation8 [shape = 's32[1]{0}', space=sflag, size = 0x4, scoped, tag = 'scoped memory for tpu_custom_call.1']
    #allocation9 [shape = 'u8[131072]{0}', space=vmem, size = 0x20000, scoped, tag = 'input window, operand 3, single buffered']
    #allocation10 [shape = 'u8[4096]{0}', space=vmem, size = 0x1000, scoped, tag = 'output window, operand 0, single buffered']
    %9 = vsyncpa [#allocation5], 0
    %s10 = scalar_lea.sflag [#allocation5], 1
    %11 = vsyncpa %s10, 0
    %12 = vsyncpa [#allocation8], 0
    %13 = vsyncpa [#allocation6], 0
    loop: start=0, step=1, limit=4
    $region2: #{tpu_custom_call.1} parent=1 // loop_pre_header
      _
    $region3: #{tpu_custom_call.1} parent=1 // loop_header
      %s15 = sphi 0, %s19
      %p16 = scmp.ge.s32.totalorder %s15, 4
      %s22 = sphi 0, %s34
      %s23 = sphi 0, %s30
      %s24 = sphi 0, %s22
      %s25 = sphi 0, %s23
      %s26 = sphi 0, %s24
      %s27 = sphi 0, %s25
      %s39 = sphi 0, %s41
      %s42 = sphi 0, %s39
      %s43 = sphi 0, %s42
      %s59 = sphi 0, %s43
      %s63 = sphi 0, %s63
      %s65 = sphi 0, %s63
      %s66 = sphi 0, %s65
      %s80 = sphi 0, %s66
      %s84 = sphi 0, %s84
      %s86 = sphi 0, %s84
      %s87 = sphi 0, %s86
      %s101 = sphi 0, %s87
      %s105 = sphi 0, %s105
      %s107 = sphi 0, %s105
      %s108 = sphi 0, %s107
      %s122 = sphi 0, %s108
      %s128 = sphi 0, %s130
      %s131 = sphi 0, %s128
      %s132 = sphi 0, %s131
      %s148 = sphi 0, %s132
    $region4: #{tpu_custom_call.1} parent=1 // loop_header_branch
      %18 = sbr.rel (%p16) target = $region8
    $region5: #{tpu_custom_call.1} parent=1 // loop_body
      %s20 = ssub.s32 %s15, 1
      %s21 = ssub.s32 %s15, 2
      %s28 = sadd.s32 1, %s23
      %p29 = scmp.ge.s32.totalorder %s28, 2
      %s30 = scalar_select %p29, 0, %s28
      %s31 = sadd.s32 1, %s22
      %s32 = scalar_select %p29, %s31, %s22
      %p33 = scmp.ge.s32.totalorder %s32, 1
      %s34 = scalar_select %p33, 0, %s32
      %s35 = ssub.s32 %s23, %s30
      %s36 = ssub.s32 %s22, %s34
      %s37 = sor.u32 %s35, %s36
      %p38 = scmp.eq.s32.totalorder %s37, 0
      %s40 = sadd.s32 %s39, 1
      %s41 = scalar_select %p38, %s39, %s40
      %p44 = pneg %p38
      %p45 = scmp.eq.s32.totalorder %s15, 1
      %p46 = por %p44, %p45
      %p47 = scmp.ne.s32.totalorder %s39, %s42
      %p48 = scmp.eq.s32.totalorder %s15, 0
      %p49 = por %p47, %p48
      %p50 = scmp.ne.s32.totalorder %s39, %s42
      %p51 = scmp.eq.s32.totalorder %s20, 1
      %p52 = por %p50, %p51
      %p53 = scmp.ne.s32.totalorder %s42, %s43
      %p54 = scmp.eq.s32.totalorder %s20, 0
      %p55 = por %p53, %p54
      %p56 = scmp.ne.s32.totalorder %s42, %s43
      %p57 = scmp.eq.s32.totalorder %s21, 1
      %p58 = por %p56, %p57
      %p60 = scmp.ne.s32.totalorder %s43, %s59
      %p61 = scmp.eq.s32.totalorder %s21, 0
      %p62 = por %p60, %p61
      %s64 = sadd.s32 %s63, 1
      %p67 = scmp.eq.s32.totalorder %s15, 1
      %p68 = scmp.ne.s32.totalorder %s63, %s65
      %p69 = scmp.eq.s32.totalorder %s15, 0
      %p70 = por %p68, %p69
      %p71 = scmp.ne.s32.totalorder %s63, %s65
      %p72 = scmp.eq.s32.totalorder %s20, 1
      %p73 = por %p71, %p72
      %p74 = scmp.ne.s32.totalorder %s65, %s66
      %p75 = scmp.eq.s32.totalorder %s20, 0
      %p76 = por %p74, %p75
      %p77 = scmp.ne.s32.totalorder %s65, %s66
      %p78 = scmp.eq.s32.totalorder %s21, 1
      %p79 = por %p77, %p78
      %p81 = scmp.ne.s32.totalorder %s66, %s80
      %p82 = scmp.eq.s32.totalorder %s21, 0
      %p83 = por %p81, %p82
      %s85 = sadd.s32 %s84, 1
      %p88 = scmp.eq.s32.totalorder %s15, 1
      %p89 = scmp.ne.s32.totalorder %s84, %s86
      %p90 = scmp.eq.s32.totalorder %s15, 0
      %p91 = por %p89, %p90
      %p92 = scmp.ne.s32.totalorder %s84, %s86
      %p93 = scmp.eq.s32.totalorder %s20, 1
      %p94 = por %p92, %p93
      %p95 = scmp.ne.s32.totalorder %s86, %s87
      %p96 = scmp.eq.s32.totalorder %s20, 0
      %p97 = por %p95, %p96
      %p98 = scmp.ne.s32.totalorder %s86, %s87
      %p99 = scmp.eq.s32.totalorder %s21, 1
      %p100 = por %p98, %p99
      %p102 = scmp.ne.s32.totalorder %s87, %s101
      %p103 = scmp.eq.s32.totalorder %s21, 0
      %p104 = por %p102, %p103
      %s106 = sadd.s32 %s105, 1
      %p109 = scmp.eq.s32.totalorder %s15, 1
      %p110 = scmp.ne.s32.totalorder %s105, %s107
      %p111 = scmp.eq.s32.totalorder %s15, 0
      %p112 = por %p110, %p111
      %p113 = scmp.ne.s32.totalorder %s105, %s107
      %p114 = scmp.eq.s32.totalorder %s20, 1
      %p115 = por %p113, %p114
      %p116 = scmp.ne.s32.totalorder %s107, %s108
      %p117 = scmp.eq.s32.totalorder %s20, 0
      %p118 = por %p116, %p117
      %p119 = scmp.ne.s32.totalorder %s107, %s108
      %p120 = scmp.eq.s32.totalorder %s21, 1
      %p121 = por %p119, %p120
      %p123 = scmp.ne.s32.totalorder %s108, %s122
      %p124 = scmp.eq.s32.totalorder %s21, 0
      %p125 = por %p123, %p124
      %s126 = ssub.s32 %s22, %s34
      %p127 = scmp.eq.s32.totalorder %s126, 0
      %s129 = sadd.s32 %s128, 1
      %s130 = scalar_select %p127, %s128, %s129
      %p133 = pneg %p127
      %p134 = scmp.eq.s32.totalorder %s15, 1
      %p135 = por %p133, %p134
      %p136 = scmp.ne.s32.totalorder %s128, %s131
      %p137 = scmp.eq.s32.totalorder %s15, 0
      %p138 = por %p136, %p137
      %p139 = scmp.ne.s32.totalorder %s128, %s131
      %p140 = scmp.eq.s32.totalorder %s20, 1
      %p141 = por %p139, %p140
      %p142 = scmp.ne.s32.totalorder %s131, %s132
      %p143 = scmp.eq.s32.totalorder %s20, 0
      %p144 = por %p142, %p143
      %p145 = scmp.ne.s32.totalorder %s131, %s132
      %p146 = scmp.eq.s32.totalorder %s21, 1
      %p147 = por %p145, %p146
      %p149 = scmp.ne.s32.totalorder %s132, %s148
      %p150 = scmp.eq.s32.totalorder %s21, 0
      %p151 = por %p149, %p150
      %p152 = scmp.le.s32.totalorder 1, %s15
      %p153 = scmp.lt.s32.totalorder %s15, 3
      %p154 = pnand %p152, %p153
      %p155 = pneg %p154
      // Predicated region
      $region9: #{tpu_custom_call.1} parent=5 // pred_check
        _
      $region10: #{tpu_custom_call.1} parent=5 // pred_check_branch
        %157 = sbr.rel (%p154) target = $region12
      $region11: #{tpu_custom_call.1} parent=5 // pred_region
        %s158 = ssub.s32 %s15, 1
        // Predicated region
        $region13: #{tpu_custom_call.1} parent=11 // pred_check
          %p159 = pneg %p76
        $region14: #{tpu_custom_call.1} parent=11 // pred_check_branch
          %161 = sbr.rel (%p159) target = $region16
        $region15: #{tpu_custom_call.1} parent=11 // pred_region
          %s163 = ssub.s32 256, 256
          %164 = vsyncadd [#allocation8], %s163
          %s165 = sshll.u32 [#allocation7], 4
          %s166 = int_to_ptr.vmem [resolvable:$true] %s165
          %171 = dma.hbm_to_vmem [thread:$0]  %s1, 256, %s166, [#allocation8], 128, 128, 8
        $region16: #{tpu_custom_call.1} parent=11 // pred_fallthru
          _
        // Predicated region
        $region17: #{tpu_custom_call.1} parent=11 // pred_check
          %p172 = pneg %p97
        $region18: #{tpu_custom_call.1} parent=11 // pred_check_branch
          %174 = sbr.rel (%p172) target = $region20
        $region19: #{tpu_custom_call.1} parent=11 // pred_region
          _
        $region20: #{tpu_custom_call.1} parent=11 // pred_fallthru
          _
        // Predicated region
        $region21: #{tpu_custom_call.1} parent=11 // pred_check
          %p175 = pneg %p118
        $region22: #{tpu_custom_call.1} parent=11 // pred_check_branch
          %177 = sbr.rel (%p175) target = $region24
        $region23: #{tpu_custom_call.1} parent=11 // pred_region
          %s179 = ssub.s32 4096, 4096
          %180 = vsyncadd [#allocation8], %s179
          %s181 = sshll.u32 [#allocation9], 4
          %s182 = int_to_ptr.vmem [resolvable:$true] %s181
          %187 = dma.hbm_to_vmem [thread:$0]  %s3, 4096, %s182, [#allocation8], 128, 128, 8
        $region24: #{tpu_custom_call.1} parent=11 // pred_fallthru
          _
      $region12: #{tpu_custom_call.1} parent=5 // pred_fallthru
        _
      %p188 = scmp.lt.s32.totalorder %s15, 2
      // Predicated region
      $region25: #{tpu_custom_call.1} parent=5 // pred_check
        %p189 = pneg %p188
      $region26: #{tpu_custom_call.1} parent=5 // pred_check_branch
        %191 = sbr.rel (%p189) target = $region28
      $region27: #{tpu_custom_call.1} parent=5 // pred_region
        // Predicated region
        $region29: #{tpu_custom_call.1} parent=27 // pred_check
          %p192 = pneg %p49
        $region30: #{tpu_custom_call.1} parent=27 // pred_check_branch
          %194 = sbr.rel (%p192) target = $region32
        $region31: #{tpu_custom_call.1} parent=27 // pred_region
          %s195 = sand.u32 %s39, 1
          %s196 = scalar_lea.sflag [#allocation5], %s195
          %s197 = sand.u32 %s39, 1
          %s198 = smul.addr %s197, 32
          %s199 = scalar_lea.vmem [#allocation4], %s198
          %s200 = smul.u32 4, %s23
          %s202 = ssub.s32 512, 512
          %203 = vsyncadd %s196, %s202
          %s204 = sadd.s32 %s22, %s200
          %s205 = smul.addr %s204, 128
          %s206 = scalar_lea.hbm %s0, %s205
          %s207 = sshll.u32 %s199, 4
          %s208 = int_to_ptr.vmem [resolvable:$true] %s207
          %213 = dma.hbm_to_vmem [thread:$0]  %s206, 512, %s208, %s196, 128, 128, 8
        $region32: #{tpu_custom_call.1} parent=27 // pred_fallthru
          _
      $region28: #{tpu_custom_call.1} parent=5 // pred_fallthru
        _
      %p214 = scmp.le.s32.totalorder 1, %s15
      %p215 = scmp.lt.s32.totalorder %s15, 3
      %p216 = pnand %p214, %p215
      %p217 = pneg %p216
      // Predicated region
      $region33: #{tpu_custom_call.1} parent=5 // pred_check
        _
      $region34: #{tpu_custom_call.1} parent=5 // pred_check_branch
        %219 = sbr.rel (%p216) target = $region36
      $region35: #{tpu_custom_call.1} parent=5 // pred_region
        %s220 = ssub.s32 %s15, 1
        %s221 = sand.u32 %s42, 1
        %s222 = scalar_lea.sflag [#allocation5], %s221
        %s223 = sand.u32 %s42, 1
        %s224 = smul.addr %s223, 32
        %s225 = scalar_lea.vmem [#allocation4], %s224
        // Predicated region
        $region37: #{tpu_custom_call.1} parent=35 // pred_check
          %p226 = pneg %p55
        $region38: #{tpu_custom_call.1} parent=35 // pred_check_branch
          %228 = sbr.rel (%p226) target = $region40
        $region39: #{tpu_custom_call.1} parent=35 // pred_region
          %229 = dma.done %s222, 512
        $region40: #{tpu_custom_call.1} parent=35 // pred_fallthru
          _
        // Predicated region
        $region41: #{tpu_custom_call.1} parent=35 // pred_check
          %p230 = pneg %p76
        $region42: #{tpu_custom_call.1} parent=35 // pred_check_branch
          %232 = sbr.rel (%p230) target = $region44
        $region43: #{tpu_custom_call.1} parent=35 // pred_region
          %233 = dma.done [#allocation8], 256
        $region44: #{tpu_custom_call.1} parent=35 // pred_fallthru
          _
        // Predicated region
        $region45: #{tpu_custom_call.1} parent=35 // pred_check
          %p234 = pneg %p118
        $region46: #{tpu_custom_call.1} parent=35 // pred_check_branch
          %236 = sbr.rel (%p234) target = $region48
        $region47: #{tpu_custom_call.1} parent=35 // pred_region
          %237 = dma.done [#allocation8], 4096
        $region48: #{tpu_custom_call.1} parent=35 // pred_fallthru
          _
        %s238 = sand.u32 %s42, 1
        %s239 = scalar_lea.sflag [#allocation5], %s238
        %s240 = sand.u32 %s42, 1
        %s241 = smul.addr %s240, 32
        %s242 = scalar_lea.vmem [#allocation4], %s241
        %p243 = pneg %p55
        %p244 = pneg %p52
        %p245 = pneg %p76
        %p246 = pneg %p73
        %p247 = pneg %p97
        %p248 = pneg %p94
        %p249 = pneg %p118
        %p250 = pneg %p115
        %p251 = pneg %p144
        %p252 = pneg %p141
        %s253 = smul.u32 4, %s25
        %p254 = scmp.eq.s32.totalorder %s25, 1
        %p255 = scmp.eq.s32.totalorder %s25, 0
        // Predicated region
        $region49: #{tpu_custom_call.1} parent=35 // pred_check
          %p256 = pneg %p255
        $region50: #{tpu_custom_call.1} parent=35 // pred_check_branch
          %258 = sbr.rel (%p256) target = $region52
        $region51: #{tpu_custom_call.1} parent=35 // pred_region
          %259 = vst [vmem:[#allocation3] sm:$0xff] 0.0
          %260 = vst [vmem:[#allocation3 + $0x8] sm:$0xff] 0.0
        $region52: #{tpu_custom_call.1} parent=35 // pred_fallthru
          _
        %v261 = vld [vmem:[#allocation7] sm:$0xff]
        %v262 = vld [vmem:[#allocation7 + $0x8] sm:$0xff]
        %v263 = vld [vmem:[#allocation9] sm:$0xff]
        %v264 = vld [vmem:[#allocation9 + $0x8] sm:$0xff]
        %v265 = vld [vmem:[#allocation9 + $0x10] sm:$0xff]
        %v266 = vld [vmem:[#allocation9 + $0x18] sm:$0xff]
        %v267 = vld [vmem:[#allocation9 + $0x20] sm:$0xff]
        %v268 = vld [vmem:[#allocation9 + $0x28] sm:$0xff]
        %v269 = vld [vmem:[#allocation9 + $0x30] sm:$0xff]
        %v270 = vld [vmem:[#allocation9 + $0x38] sm:$0xff]
        %v271 = vld [vmem:[#allocation9 + $0x40] sm:$0xff]
        %v272 = vld [vmem:[#allocation9 + $0x48] sm:$0xff]
        %v273 = vld [vmem:[#allocation9 + $0x50] sm:$0xff]
        %v274 = vld [vmem:[#allocation9 + $0x58] sm:$0xff]
        %v275 = vld [vmem:[#allocation9 + $0x60] sm:$0xff]
        %v276 = vld [vmem:[#allocation9 + $0x68] sm:$0xff]
        %v277 = vld [vmem:[#allocation9 + $0x70] sm:$0xff]
        %v278 = vld [vmem:[#allocation9 + $0x78] sm:$0xff]
        %v279 = vld [vmem:[#allocation9 + $0x80] sm:$0xff]
        %v280 = vld [vmem:[#allocation9 + $0x88] sm:$0xff]
        %v281 = vld [vmem:[#allocation9 + $0x90] sm:$0xff]
        %v282 = vld [vmem:[#allocation9 + $0x98] sm:$0xff]
        %v283 = vld [vmem:[#allocation9 + $0xa0] sm:$0xff]
        %v284 = vld [vmem:[#allocation9 + $0xa8] sm:$0xff]
        %v285 = vld [vmem:[#allocation9 + $0xb0] sm:$0xff]
        %v286 = vld [vmem:[#allocation9 + $0xb8] sm:$0xff]
        %v287 = vld [vmem:[#allocation9 + $0xc0] sm:$0xff]
        %v288 = vld [vmem:[#allocation9 + $0xc8] sm:$0xff]
        %v289 = vld [vmem:[#allocation9 + $0xd0] sm:$0xff]
        %v290 = vld [vmem:[#allocation9 + $0xd8] sm:$0xff]
        %v291 = vld [vmem:[#allocation9 + $0xe0] sm:$0xff]
        %v292 = vld [vmem:[#allocation9 + $0xe8] sm:$0xff]
        %v293 = vld [vmem:[#allocation9 + $0xf0] sm:$0xff]
        %v294 = vld [vmem:[#allocation9 + $0xf8] sm:$0xff]
        %v295 = vld [vmem:[%s2] sm:$0x1]
        %v297 = vlaneseq
        %v298 = vshrl.u32 %v297, 7
        %v299 = vsub.s32 0, %v298
        %v300 = vrot.slane %v295, %v299
        %v302 = vld [vmem:[%s225] sm:$0xff]
        %vm303 = vcmask 130048
        %v305 = vsel %vm303, %v302, 0
        %307 = vmatprep.subr.mxu0 0.0
        %308 = vmatpush1.msra.mxu0 0.0
        %309 = vmatprep.subr.mxu0 0.0
        %310 = vmatpush1.msra.mxu0 0.0
        %311 = vmatprep.subr.mxu0 0.0
        %312 = vmatpush1.msra.mxu0 0.0
        %313 = vmatprep.subr.mxu0 0.0
        %314 = vmatpush1.msra.mxu0 0.0
        %315 = vmatprep.subr.mxu0 0.0
        %316 = vmatpush1.msra.mxu0 0.0
        %317 = vmatprep.subr.mxu0 0.0
        %318 = vmatpush1.msra.mxu0 0.0
        %319 = vmatprep.subr.mxu0 0.0
        %320 = vmatpush1.msra.mxu0 0.0
        %321 = vmatprep.subr.mxu0 0.0
        %322 = vmatpush1.msra.mxu0 0.0
        %323 = vmatprep.subr.mxu0 0.0
        %324 = vmatpush1.msra.mxu0 0.0
        %325 = vmatprep.subr.mxu0 0.0
        %326 = vmatpush1.msra.mxu0 0.0
        %327 = vmatprep.subr.mxu0 0.0
        %328 = vmatpush1.msra.mxu0 0.0
        %329 = vmatprep.subr.mxu0 0.0
        %330 = vmatpush1.msra.mxu0 0.0
        %331 = vmatprep.subr.mxu0 0.0
        %332 = vmatpush1.msra.mxu0 0.0
        %333 = vmatprep.subr.mxu0 0.0
        %334 = vmatpush1.msra.mxu0 0.0
        %335 = vmatprep.subr.mxu0 0.0
        %336 = vmatpush1.msra.mxu0 %v262
        %337 = vmatprep.subr.mxu0 0.0
        %338 = vmatpush1.msra.mxu0 %v261
        %339 = vmatprep.subr.mxu0 0.0
        %340 = vmatpush2.msra.mxu0 0.0
        %341 = vmatprep.subr.mxu0 0.0
        %342 = vmatpush2.msra.mxu0 0.0
        %343 = vmatprep.subr.mxu0 0.0
        %344 = vmatpush2.msra.mxu0 0.0
        %345 = vmatprep.subr.mxu0 0.0
        %346 = vmatpush2.msra.mxu0 0.0
        %347 = vmatprep.subr.mxu0 0.0
        %348 = vmatpush2.msra.mxu0 0.0
        %349 = vmatprep.subr.mxu0 0.0
        %350 = vmatpush2.msra.mxu0 0.0
        %351 = vmatprep.subr.mxu0 0.0
        %352 = vmatpush2.msra.mxu0 0.0
        %353 = vmatprep.subr.mxu0 0.0
        %354 = vmatpush2.msra.mxu0 0.0
        %355 = vmatprep.subr.mxu0 0.0
        %356 = vmatpush2.msra.mxu0 0.0
        %357 = vmatprep.subr.mxu0 0.0
        %358 = vmatpush2.msra.mxu0 0.0
        %359 = vmatprep.subr.mxu0 0.0
        %360 = vmatpush2.msra.mxu0 0.0
        %361 = vmatprep.subr.mxu0 0.0
        %362 = vmatpush2.msra.mxu0 0.0
        %363 = vmatprep.subr.mxu0 0.0
        %364 = vmatpush2.msra.mxu0 0.0
        %365 = vmatprep.subr.mxu0 0.0
        %366 = vmatpush2.msra.mxu0 0.0
        %367 = vmatprep.subr.mxu0 0.0
        %368 = vmatpush2.msra.mxu0 0.0
        %369 = vmatprep.subr.mxu0 0.0
        %370 = vmatpush2.msra.mxu0 0.0
        %371 = vmatprep.mubr.f32.mxu0 0.0
        %372 = vmatmul.mubr.f32.gmra.mxu0 %v305
        %v373 = vpop.f32.mrf.mxu0
        %v374 = vadd.f32 %v300, %v373
        %v375 = vpop.f32.mrf.mxu0
        %376 = vdwg.mxu0
        %377 = vst [vmem:[#allocation2] sm:$0xff] %v374
        %s378 = scalar_lea.vmem %s225, 8 [#allocation4]
        %v379 = vld [vmem:[%s378] sm:$0xff]
        %v381 = vsel %vm303, %v379, 0
        %383 = vmatprep.subr.mxu0 0.0
        %384 = vmatpush1.msra.mxu0 0.0
        %385 = vmatprep.subr.mxu0 0.0
        %386 = vmatpush1.msra.mxu0 0.0
        %387 = vmatprep.subr.mxu0 0.0
        %388 = vmatpush1.msra.mxu0 0.0
        %389 = vmatprep.subr.mxu0 0.0
        %390 = vmatpush1.msra.mxu0 0.0
        %391 = vmatprep.subr.mxu0 0.0
        %392 = vmatpush1.msra.mxu0 0.0
        %393 = vmatprep.subr.mxu0 0.0
        %394 = vmatpush1.msra.mxu0 0.0
        %395 = vmatprep.subr.mxu0 0.0
        %396 = vmatpush1.msra.mxu0 0.0
        %397 = vmatprep.subr.mxu0 0.0
        %398 = vmatpush1.msra.mxu0 0.0
        %399 = vmatprep.subr.mxu0 0.0
        %400 = vmatpush1.msra.mxu0 0.0
        %401 = vmatprep.subr.mxu0 0.0
        %402 = vmatpush1.msra.mxu0 0.0
        %403 = vmatprep.subr.mxu0 0.0
        %404 = vmatpush1.msra.mxu0 0.0
        %405 = vmatprep.subr.mxu0 0.0
        %406 = vmatpush1.msra.mxu0 0.0
        %407 = vmatprep.subr.mxu0 0.0
        %408 = vmatpush1.msra.mxu0 0.0
        %409 = vmatprep.subr.mxu0 0.0
        %410 = vmatpush1.msra.mxu0 0.0
        %411 = vmatprep.subr.mxu0 0.0
        %412 = vmatpush1.msra.mxu0 %v262
        %413 = vmatprep.subr.mxu0 0.0
        %414 = vmatpush1.msra.mxu0 %v261
        %415 = vmatprep.subr.mxu0 0.0
        %416 = vmatpush2.msra.mxu0 0.0
        %417 = vmatprep.subr.mxu0 0.0
        %418 = vmatpush2.msra.mxu0 0.0
        %419 = vmatprep.subr.mxu0 0.0
        %420 = vmatpush2.msra.mxu0 0.0
        %421 = vmatprep.subr.mxu0 0.0
        %422 = vmatpush2.msra.mxu0 0.0
        %423 = vmatprep.subr.mxu0 0.0
        %424 = vmatpush2.msra.mxu0 0.0
        %425 = vmatprep.subr.mxu0 0.0
        %426 = vmatpush2.msra.mxu0 0.0
        %427 = vmatprep.subr.mxu0 0.0
        %428 = vmatpush2.msra.mxu0 0.0
        %429 = vmatprep.subr.mxu0 0.0
        %430 = vmatpush2.msra.mxu0 0.0
        %431 = vmatprep.subr.mxu0 0.0
        %432 = vmatpush2.msra.mxu0 0.0
        %433 = vmatprep.subr.mxu0 0.0
        %434 = vmatpush2.msra.mxu0 0.0
        %435 = vmatprep.subr.mxu0 0.0
        %436 = vmatpush2.msra.mxu0 0.0
        %437 = vmatprep.subr.mxu0 0.0
        %438 = vmatpush2.msra.mxu0 0.0
        %439 = vmatprep.subr.mxu0 0.0
        %440 = vmatpush2.msra.mxu0 0.0
        %441 = vmatprep.subr.mxu0 0.0
        %442 = vmatpush2.msra.mxu0 0.0
        %443 = vmatprep.subr.mxu0 0.0
        %444 = vmatpush2.msra.mxu0 0.0
        %445 = vmatprep.subr.mxu0 0.0
        %446 = vmatpush2.msra.mxu0 0.0
        %447 = vmatprep.mubr.f32.mxu0 0.0
        %448 = vmatmul.mubr.f32.gmra.mxu0 %v381
        %v449 = vpop.f32.mrf.mxu0
        %v450 = vadd.f32 %v300, %v449
        %v451 = vpop.f32.mrf.mxu0
        %452 = vdwg.mxu0
        %s453 = scalar_lea.vmem [#allocation2], 8
        %454 = vst [vmem:[%s453] sm:$0xff] %v450
        %s455 = scalar_lea.vmem %s225, 16 [#allocation4]
        %v456 = vld [vmem:[%s455] sm:$0xff]
        %v458 = vsel %vm303, %v456, 0
        %460 = vmatprep.subr.mxu0 0.0
        %461 = vmatpush1.msra.mxu0 0.0
        %462 = vmatprep.subr.mxu0 0.0
        %463 = vmatpush1.msra.mxu0 0.0
        %464 = vmatprep.subr.mxu0 0.0
        %465 = vmatpush1.msra.mxu0 0.0
        %466 = vmatprep.subr.mxu0 0.0
        %467 = vmatpush1.msra.mxu0 0.0
        %468 = vmatprep.subr.mxu0 0.0
        %469 = vmatpush1.msra.mxu0 0.0
        %470 = vmatprep.subr.mxu0 0.0
        %471 = vmatpush1.msra.mxu0 0.0
        %472 = vmatprep.subr.mxu0 0.0
        %473 = vmatpush1.msra.mxu0 0.0
        %474 = vmatprep.subr.mxu0 0.0
        %475 = vmatpush1.msra.mxu0 0.0
        %476 = vmatprep.subr.mxu0 0.0
        %477 = vmatpush1.msra.mxu0 0.0
        %478 = vmatprep.subr.mxu0 0.0
        %479 = vmatpush1.msra.mxu0 0.0
        %480 = vmatprep.subr.mxu0 0.0
        %481 = vmatpush1.msra.mxu0 0.0
        %482 = vmatprep.subr.mxu0 0.0
        %483 = vmatpush1.msra.mxu0 0.0
        %484 = vmatprep.subr.mxu0 0.0
        %485 = vmatpush1.msra.mxu0 0.0
        %486 = vmatprep.subr.mxu0 0.0
        %487 = vmatpush1.msra.mxu0 0.0
        %488 = vmatprep.subr.mxu0 0.0
        %489 = vmatpush1.msra.mxu0 %v262
        %490 = vmatprep.subr.mxu0 0.0
        %491 = vmatpush1.msra.mxu0 %v261
        %492 = vmatprep.subr.mxu0 0.0
        %493 = vmatpush2.msra.mxu0 0.0
        %494 = vmatprep.subr.mxu0 0.0
        %495 = vmatpush2.msra.mxu0 0.0
        %496 = vmatprep.subr.mxu0 0.0
        %497 = vmatpush2.msra.mxu0 0.0
        %498 = vmatprep.subr.mxu0 0.0
        %499 = vmatpush2.msra.mxu0 0.0
        %500 = vmatprep.subr.mxu0 0.0
        %501 = vmatpush2.msra.mxu0 0.0
        %502 = vmatprep.subr.mxu0 0.0
        %503 = vmatpush2.msra.mxu0 0.0
        %504 = vmatprep.subr.mxu0 0.0
        %505 = vmatpush2.msra.mxu0 0.0
        %506 = vmatprep.subr.mxu0 0.0
        %507 = vmatpush2.msra.mxu0 0.0
        %508 = vmatprep.subr.mxu0 0.0
        %509 = vmatpush2.msra.mxu0 0.0
        %510 = vmatprep.subr.mxu0 0.0
        %511 = vmatpush2.msra.mxu0 0.0
        %512 = vmatprep.subr.mxu0 0.0
        %513 = vmatpush2.msra.mxu0 0.0
        %514 = vmatprep.subr.mxu0 0.0
        %515 = vmatpush2.msra.mxu0 0.0
        %516 = vmatprep.subr.mxu0 0.0
        %517 = vmatpush2.msra.mxu0 0.0
        %518 = vmatprep.subr.mxu0 0.0
        %519 = vmatpush2.msra.mxu0 0.0
        %520 = vmatprep.subr.mxu0 0.0
        %521 = vmatpush2.msra.mxu0 0.0
        %522 = vmatprep.subr.mxu0 0.0
        %523 = vmatpush2.msra.mxu0 0.0
        %524 = vmatprep.mubr.f32.mxu0 0.0
        %525 = vmatmul.mubr.f32.gmra.mxu0 %v458
        %v526 = vpop.f32.mrf.mxu0
        %v527 = vadd.f32 %v300, %v526
        %v528 = vpop.f32.mrf.mxu0
        %529 = vdwg.mxu0
        %s530 = scalar_lea.vmem [#allocation2], 16
        %531 = vst [vmem:[%s530] sm:$0xff] %v527
        %s532 = scalar_lea.vmem %s225, 24 [#allocation4]
        %v533 = vld [vmem:[%s532] sm:$0xff]
        %v535 = vsel %vm303, %v533, 0
        %537 = vmatprep.subr.mxu0 0.0
        %538 = vmatpush1.msra.mxu0 0.0
        %539 = vmatprep.subr.mxu0 0.0
        %540 = vmatpush1.msra.mxu0 0.0
        %541 = vmatprep.subr.mxu0 0.0
        %542 = vmatpush1.msra.mxu0 0.0
        %543 = vmatprep.subr.mxu0 0.0
        %544 = vmatpush1.msra.mxu0 0.0
        %545 = vmatprep.subr.mxu0 0.0
        %546 = vmatpush1.msra.mxu0 0.0
        %547 = vmatprep.subr.mxu0 0.0
        %548 = vmatpush1.msra.mxu0 0.0
        %549 = vmatprep.subr.mxu0 0.0
        %550 = vmatpush1.msra.mxu0 0.0
        %551 = vmatprep.subr.mxu0 0.0
        %552 = vmatpush1.msra.mxu0 0.0
        %553 = vmatprep.subr.mxu0 0.0
        %554 = vmatpush1.msra.mxu0 0.0
        %555 = vmatprep.subr.mxu0 0.0
        %556 = vmatpush1.msra.mxu0 0.0
        %557 = vmatprep.subr.mxu0 0.0
        %558 = vmatpush1.msra.mxu0 0.0
        %559 = vmatprep.subr.mxu0 0.0
        %560 = vmatpush1.msra.mxu0 0.0
        %561 = vmatprep.subr.mxu0 0.0
        %562 = vmatpush1.msra.mxu0 0.0
        %563 = vmatprep.subr.mxu0 0.0
        %564 = vmatpush1.msra.mxu0 0.0
        %565 = vmatprep.subr.mxu0 0.0
        %566 = vmatpush1.msra.mxu0 %v262
        %567 = vmatprep.subr.mxu0 0.0
        %568 = vmatpush1.msra.mxu0 %v261
        %569 = vmatprep.subr.mxu0 0.0
        %570 = vmatpush2.msra.mxu0 0.0
        %571 = vmatprep.subr.mxu0 0.0
        %572 = vmatpush2.msra.mxu0 0.0
        %573 = vmatprep.subr.mxu0 0.0
        %574 = vmatpush2.msra.mxu0 0.0
        %575 = vmatprep.subr.mxu0 0.0
        %576 = vmatpush2.msra.mxu0 0.0
        %577 = vmatprep.subr.mxu0 0.0
        %578 = vmatpush2.msra.mxu0 0.0
        %579 = vmatprep.subr.mxu0 0.0
        %580 = vmatpush2.msra.mxu0 0.0
        %581 = vmatprep.subr.mxu0 0.0
        %582 = vmatpush2.msra.mxu0 0.0
        %583 = vmatprep.subr.mxu0 0.0
        %584 = vmatpush2.msra.mxu0 0.0
        %585 = vmatprep.subr.mxu0 0.0
        %586 = vmatpush2.msra.mxu0 0.0
        %587 = vmatprep.subr.mxu0 0.0
        %588 = vmatpush2.msra.mxu0 0.0
        %589 = vmatprep.subr.mxu0 0.0
        %590 = vmatpush2.msra.mxu0 0.0
        %591 = vmatprep.subr.mxu0 0.0
        %592 = vmatpush2.msra.mxu0 0.0
        %593 = vmatprep.subr.mxu0 0.0
        %594 = vmatpush2.msra.mxu0 0.0
        %595 = vmatprep.subr.mxu0 0.0
        %596 = vmatpush2.msra.mxu0 0.0
        %597 = vmatprep.subr.mxu0 0.0
        %598 = vmatpush2.msra.mxu0 0.0
        %599 = vmatprep.subr.mxu0 0.0
        %600 = vmatpush2.msra.mxu0 0.0
        %601 = vmatprep.mubr.f32.mxu0 0.0
        %602 = vmatmul.mubr.f32.gmra.mxu0 %v535
        %v603 = vpop.f32.mrf.mxu0
        %v604 = vadd.f32 %v300, %v603
        %v605 = vpop.f32.mrf.mxu0
        %606 = vdwg.mxu0
        %s607 = scalar_lea.vmem [#allocation2], 24
        %608 = vst [vmem:[%s607] sm:$0xff] %v604
        %v609 = vld [vmem:[#allocation3] sm:$0xff]
        %v610 = vld [vmem:[#allocation3 + $0x8] sm:$0xff]
        %v611 = vld [vmem:[#allocation2] sm:$0xff]
        %612 = vmatprep.subr.mxu0 0.0
        %613 = vmatpush1.msra.mxu0 %v278
        %614 = vmatprep.subr.mxu0 0.0
        %615 = vmatpush1.msra.mxu0 %v277
        %616 = vmatprep.subr.mxu0 0.0
        %617 = vmatpush1.msra.mxu0 %v276
        %618 = vmatprep.subr.mxu0 0.0
        %619 = vmatpush1.msra.mxu0 %v275
        %620 = vmatprep.subr.mxu0 0.0
        %621 = vmatpush1.msra.mxu0 %v274
        %622 = vmatprep.subr.mxu0 0.0
        %623 = vmatpush1.msra.mxu0 %v273
        %624 = vmatprep.subr.mxu0 0.0
        %625 = vmatpush1.msra.mxu0 %v272
        %626 = vmatprep.subr.mxu0 0.0
        %627 = vmatpush1.msra.mxu0 %v271
        %628 = vmatprep.subr.mxu0 0.0
        %629 = vmatpush1.msra.mxu0 %v270
        %630 = vmatprep.subr.mxu0 0.0
        %631 = vmatpush1.msra.mxu0 %v269
        %632 = vmatprep.subr.mxu0 0.0
        %633 = vmatpush1.msra.mxu0 %v268
        %634 = vmatprep.subr.mxu0 0.0
        %635 = vmatpush1.msra.mxu0 %v267
        %636 = vmatprep.subr.mxu0 0.0
        %637 = vmatpush1.msra.mxu0 %v266
        %638 = vmatprep.subr.mxu0 0.0
        %639 = vmatpush1.msra.mxu0 %v265
        %640 = vmatprep.subr.mxu0 0.0
        %641 = vmatpush1.msra.mxu0 %v264
        %642 = vmatprep.subr.mxu0 0.0
        %643 = vmatpush1.msra.mxu0 %v263
        %644 = vmatprep.subr.mxu0 0.0
        %645 = vmatpush2.msra.mxu0 %v294
        %646 = vmatprep.subr.mxu0 0.0
        %647 = vmatpush2.msra.mxu0 %v293
        %648 = vmatprep.subr.mxu0 0.0
        %649 = vmatpush2.msra.mxu0 %v292
        %650 = vmatprep.subr.mxu0 0.0
        %651 = vmatpush2.msra.mxu0 %v291
        %652 = vmatprep.subr.mxu0 0.0
        %653 = vmatpush2.msra.mxu0 %v290
        %654 = vmatprep.subr.mxu0 0.0
        %655 = vmatpush2.msra.mxu0 %v289
        %656 = vmatprep.subr.mxu0 0.0
        %657 = vmatpush2.msra.mxu0 %v288
        %658 = vmatprep.subr.mxu0 0.0
        %659 = vmatpush2.msra.mxu0 %v287
        %660 = vmatprep.subr.mxu0 0.0
        %661 = vmatpush2.msra.mxu0 %v286
        %662 = vmatprep.subr.mxu0 0.0
        %663 = vmatpush2.msra.mxu0 %v285
        %664 = vmatprep.subr.mxu0 0.0
        %665 = vmatpush2.msra.mxu0 %v284
        %666 = vmatprep.subr.mxu0 0.0
        %667 = vmatpush2.msra.mxu0 %v283
        %668 = vmatprep.subr.mxu0 0.0
        %669 = vmatpush2.msra.mxu0 %v282
        %670 = vmatprep.subr.mxu0 0.0
        %671 = vmatpush2.msra.mxu0 %v281
        %672 = vmatprep.subr.mxu0 0.0
        %673 = vmatpush2.msra.mxu0 %v280
        %674 = vmatprep.subr.mxu0 0.0
        %675 = vmatpush2.msra.mxu0 %v279
        %676 = vmatprep.mubr.f32.mxu0 %v610
        %677 = vmatmul.mubr.f32.gmra.mxu0 %v609
        %v678 = vpop.f32.mrf.mxu0
        %v679 = vadd.f32 %v611, %v678
        %v680 = vpop.f32.mrf.mxu0
        %681 = vdwg.mxu0
        %v682 = vtanh.pop %v679
        %v683 = vmul.f32 %v609, 1.3
        %v684 = vsub.f32 %v682, %v683
        %v685 = vmul.f32 %v610, 12.7
        %v686 = vsub.f32 %v684, %v685
        %v687 = vmul.f32 %v686, 0.05
        %v688 = vadd.f32 %v610, %v687
        %v689 = vmul.f32 %v688, 0.05
        %v690 = vadd.f32 %v609, %v689
        %v691 = vld [vmem:[%s453] sm:$0xff]
        %692 = vmatprep.subr.mxu0 0.0
        %693 = vmatpush1.msra.mxu0 %v278
        %694 = vmatprep.subr.mxu0 0.0
        %695 = vmatpush1.msra.mxu0 %v277
        %696 = vmatprep.subr.mxu0 0.0
        %697 = vmatpush1.msra.mxu0 %v276
        %698 = vmatprep.subr.mxu0 0.0
        %699 = vmatpush1.msra.mxu0 %v275
        %700 = vmatprep.subr.mxu0 0.0
        %701 = vmatpush1.msra.mxu0 %v274
        %702 = vmatprep.subr.mxu0 0.0
        %703 = vmatpush1.msra.mxu0 %v273
        %704 = vmatprep.subr.mxu0 0.0
        %705 = vmatpush1.msra.mxu0 %v272
        %706 = vmatprep.subr.mxu0 0.0
        %707 = vmatpush1.msra.mxu0 %v271
        %708 = vmatprep.subr.mxu0 0.0
        %709 = vmatpush1.msra.mxu0 %v270
        %710 = vmatprep.subr.mxu0 0.0
        %711 = vmatpush1.msra.mxu0 %v269
        %712 = vmatprep.subr.mxu0 0.0
        %713 = vmatpush1.msra.mxu0 %v268
        %714 = vmatprep.subr.mxu0 0.0
        %715 = vmatpush1.msra.mxu0 %v267
        %716 = vmatprep.subr.mxu0 0.0
        %717 = vmatpush1.msra.mxu0 %v266
        %718 = vmatprep.subr.mxu0 0.0
        %719 = vmatpush1.msra.mxu0 %v265
        %720 = vmatprep.subr.mxu0 0.0
        %721 = vmatpush1.msra.mxu0 %v264
        %722 = vmatprep.subr.mxu0 0.0
        %723 = vmatpush1.msra.mxu0 %v263
        %724 = vmatprep.subr.mxu0 0.0
        %725 = vmatpush2.msra.mxu0 %v294
        %726 = vmatprep.subr.mxu0 0.0
        %727 = vmatpush2.msra.mxu0 %v293
        %728 = vmatprep.subr.mxu0 0.0
        %729 = vmatpush2.msra.mxu0 %v292
        %730 = vmatprep.subr.mxu0 0.0
        %731 = vmatpush2.msra.mxu0 %v291
        %732 = vmatprep.subr.mxu0 0.0
        %733 = vmatpush2.msra.mxu0 %v290
        %734 = vmatprep.subr.mxu0 0.0
        %735 = vmatpush2.msra.mxu0 %v289
        %736 = vmatprep.subr.mxu0 0.0
        %737 = vmatpush2.msra.mxu0 %v288
        %738 = vmatprep.subr.mxu0 0.0
        %739 = vmatpush2.msra.mxu0 %v287
        %740 = vmatprep.subr.mxu0 0.0
        %741 = vmatpush2.msra.mxu0 %v286
        %742 = vmatprep.subr.mxu0 0.0
        %743 = vmatpush2.msra.mxu0 %v285
        %744 = vmatprep.subr.mxu0 0.0
        %745 = vmatpush2.msra.mxu0 %v284
        %746 = vmatprep.subr.mxu0 0.0
        %747 = vmatpush2.msra.mxu0 %v283
        %748 = vmatprep.subr.mxu0 0.0
        %749 = vmatpush2.msra.mxu0 %v282
        %750 = vmatprep.subr.mxu0 0.0
        %751 = vmatpush2.msra.mxu0 %v281
        %752 = vmatprep.subr.mxu0 0.0
        %753 = vmatpush2.msra.mxu0 %v280
        %754 = vmatprep.subr.mxu0 0.0
        %755 = vmatpush2.msra.mxu0 %v279
        %756 = vmatprep.mubr.f32.mxu0 %v688
        %757 = vmatmul.mubr.f32.gmra.mxu0 %v690
        %v758 = vpop.f32.mrf.mxu0
        %v759 = vadd.f32 %v691, %v758
        %v760 = vpop.f32.mrf.mxu0
        %761 = vdwg.mxu0
        %v762 = vtanh.pop %v759
        %v763 = vmul.f32 %v690, 1.3
        %v764 = vsub.f32 %v762, %v763
        %v765 = vmul.f32 %v688, 12.7
        %v766 = vsub.f32 %v764, %v765
        %v767 = vmul.f32 %v766, 0.05
        %v768 = vadd.f32 %v688, %v767
        %v769 = vmul.f32 %v768, 0.05
        %v770 = vadd.f32 %v690, %v769
        %v771 = vld [vmem:[%s530] sm:$0xff]
        %772 = vmatprep.subr.mxu0 0.0
        %773 = vmatpush1.msra.mxu0 %v278
        %774 = vmatprep.subr.mxu0 0.0
        %775 = vmatpush1.msra.mxu0 %v277
        %776 = vmatprep.subr.mxu0 0.0
        %777 = vmatpush1.msra.mxu0 %v276
        %778 = vmatprep.subr.mxu0 0.0
        %779 = vmatpush1.msra.mxu0 %v275
        %780 = vmatprep.subr.mxu0 0.0
        %781 = vmatpush1.msra.mxu0 %v274
        %782 = vmatprep.subr.mxu0 0.0
        %783 = vmatpush1.msra.mxu0 %v273
        %784 = vmatprep.subr.mxu0 0.0
        %785 = vmatpush1.msra.mxu0 %v272
        %786 = vmatprep.subr.mxu0 0.0
        %787 = vmatpush1.msra.mxu0 %v271
        %788 = vmatprep.subr.mxu0 0.0
        %789 = vmatpush1.msra.mxu0 %v270
        %790 = vmatprep.subr.mxu0 0.0
        %791 = vmatpush1.msra.mxu0 %v269
        %792 = vmatprep.subr.mxu0 0.0
        %793 = vmatpush1.msra.mxu0 %v268
        %794 = vmatprep.subr.mxu0 0.0
        %795 = vmatpush1.msra.mxu0 %v267
        %796 = vmatprep.subr.mxu0 0.0
        %797 = vmatpush1.msra.mxu0 %v266
        %798 = vmatprep.subr.mxu0 0.0
        %799 = vmatpush1.msra.mxu0 %v265
        %800 = vmatprep.subr.mxu0 0.0
        %801 = vmatpush1.msra.mxu0 %v264
        %802 = vmatprep.subr.mxu0 0.0
        %803 = vmatpush1.msra.mxu0 %v263
        %804 = vmatprep.subr.mxu0 0.0
        %805 = vmatpush2.msra.mxu0 %v294
        %806 = vmatprep.subr.mxu0 0.0
        %807 = vmatpush2.msra.mxu0 %v293
        %808 = vmatprep.subr.mxu0 0.0
        %809 = vmatpush2.msra.mxu0 %v292
        %810 = vmatprep.subr.mxu0 0.0
        %811 = vmatpush2.msra.mxu0 %v291
        %812 = vmatprep.subr.mxu0 0.0
        %813 = vmatpush2.msra.mxu0 %v290
        %814 = vmatprep.subr.mxu0 0.0
        %815 = vmatpush2.msra.mxu0 %v289
        %816 = vmatprep.subr.mxu0 0.0
        %817 = vmatpush2.msra.mxu0 %v288
        %818 = vmatprep.subr.mxu0 0.0
        %819 = vmatpush2.msra.mxu0 %v287
        %820 = vmatprep.subr.mxu0 0.0
        %821 = vmatpush2.msra.mxu0 %v286
        %822 = vmatprep.subr.mxu0 0.0
        %823 = vmatpush2.msra.mxu0 %v285
        %824 = vmatprep.subr.mxu0 0.0
        %825 = vmatpush2.msra.mxu0 %v284
        %826 = vmatprep.subr.mxu0 0.0
        %827 = vmatpush2.msra.mxu0 %v283
        %828 = vmatprep.subr.mxu0 0.0
        %829 = vmatpush2.msra.mxu0 %v282
        %830 = vmatprep.subr.mxu0 0.0
        %831 = vmatpush2.msra.mxu0 %v281
        %832 = vmatprep.subr.mxu0 0.0
        %833 = vmatpush2.msra.mxu0 %v280
        %834 = vmatprep.subr.mxu0 0.0
        %835 = vmatpush2.msra.mxu0 %v279
        %836 = vmatprep.mubr.f32.mxu0 %v768
        %837 = vmatmul.mubr.f32.gmra.mxu0 %v770
        %v838 = vpop.f32.mrf.mxu0
        %v839 = vadd.f32 %v771, %v838
        %v840 = vpop.f32.mrf.mxu0
        %841 = vdwg.mxu0
        %v842 = vtanh.pop %v839
        %v843 = vmul.f32 %v770, 1.3
        %v844 = vsub.f32 %v842, %v843
        %v845 = vmul.f32 %v768, 12.7
        %v846 = vsub.f32 %v844, %v845
        %v847 = vmul.f32 %v846, 0.05
        %v848 = vadd.f32 %v768, %v847
        %v849 = vmul.f32 %v848, 0.05
        %v850 = vadd.f32 %v770, %v849
        %v851 = vld [vmem:[%s607] sm:$0xff]
        %852 = vmatprep.subr.mxu0 0.0
        %853 = vmatpush1.msra.mxu0 %v278
        %854 = vmatprep.subr.mxu0 0.0
        %855 = vmatpush1.msra.mxu0 %v277
        %856 = vmatprep.subr.mxu0 0.0
        %857 = vmatpush1.msra.mxu0 %v276
        %858 = vmatprep.subr.mxu0 0.0
        %859 = vmatpush1.msra.mxu0 %v275
        %860 = vmatprep.subr.mxu0 0.0
        %861 = vmatpush1.msra.mxu0 %v274
        %862 = vmatprep.subr.mxu0 0.0
        %863 = vmatpush1.msra.mxu0 %v273
        %864 = vmatprep.subr.mxu0 0.0
        %865 = vmatpush1.msra.mxu0 %v272
        %866 = vmatprep.subr.mxu0 0.0
        %867 = vmatpush1.msra.mxu0 %v271
        %868 = vmatprep.subr.mxu0 0.0
        %869 = vmatpush1.msra.mxu0 %v270
        %870 = vmatprep.subr.mxu0 0.0
        %871 = vmatpush1.msra.mxu0 %v269
        %872 = vmatprep.subr.mxu0 0.0
        %873 = vmatpush1.msra.mxu0 %v268
        %874 = vmatprep.subr.mxu0 0.0
        %875 = vmatpush1.msra.mxu0 %v267
        %876 = vmatprep.subr.mxu0 0.0
        %877 = vmatpush1.msra.mxu0 %v266
        %878 = vmatprep.subr.mxu0 0.0
        %879 = vmatpush1.msra.mxu0 %v265
        %880 = vmatprep.subr.mxu0 0.0
        %881 = vmatpush1.msra.mxu0 %v264
        %882 = vmatprep.subr.mxu0 0.0
        %883 = vmatpush1.msra.mxu0 %v263
        %884 = vmatprep.subr.mxu0 0.0
        %885 = vmatpush2.msra.mxu0 %v294
        %886 = vmatprep.subr.mxu0 0.0
        %887 = vmatpush2.msra.mxu0 %v293
        %888 = vmatprep.subr.mxu0 0.0
        %889 = vmatpush2.msra.mxu0 %v292
        %890 = vmatprep.subr.mxu0 0.0
        %891 = vmatpush2.msra.mxu0 %v291
        %892 = vmatprep.subr.mxu0 0.0
        %893 = vmatpush2.msra.mxu0 %v290
        %894 = vmatprep.subr.mxu0 0.0
        %895 = vmatpush2.msra.mxu0 %v289
        %896 = vmatprep.subr.mxu0 0.0
        %897 = vmatpush2.msra.mxu0 %v288
        %898 = vmatprep.subr.mxu0 0.0
        %899 = vmatpush2.msra.mxu0 %v287
        %900 = vmatprep.subr.mxu0 0.0
        %901 = vmatpush2.msra.mxu0 %v286
        %902 = vmatprep.subr.mxu0 0.0
        %903 = vmatpush2.msra.mxu0 %v285
        %904 = vmatprep.subr.mxu0 0.0
        %905 = vmatpush2.msra.mxu0 %v284
        %906 = vmatprep.subr.mxu0 0.0
        %907 = vmatpush2.msra.mxu0 %v283
        %908 = vmatprep.subr.mxu0 0.0
        %909 = vmatpush2.msra.mxu0 %v282
        %910 = vmatprep.subr.mxu0 0.0
        %911 = vmatpush2.msra.mxu0 %v281
        %912 = vmatprep.subr.mxu0 0.0
        %913 = vmatpush2.msra.mxu0 %v280
        %914 = vmatprep.subr.mxu0 0.0
        %915 = vmatpush2.msra.mxu0 %v279
        %916 = vmatprep.mubr.f32.mxu0 %v848
        %917 = vmatmul.mubr.f32.gmra.mxu0 %v850
        %v918 = vpop.f32.mrf.mxu0
        %v919 = vadd.f32 %v851, %v918
        %v920 = vpop.f32.mrf.mxu0
        %921 = vdwg.mxu0
        %v922 = vtanh.pop %v919
        %v923 = vmul.f32 %v850, 1.3
        %v924 = vsub.f32 %v922, %v923
        %v925 = vmul.f32 %v848, 12.7
        %v926 = vsub.f32 %v924, %v925
        %v927 = vmul.f32 %v926, 0.05
        %v928 = vadd.f32 %v848, %v927
        %v929 = vmul.f32 %v928, 0.05
        %v930 = vadd.f32 %v850, %v929
        %p931 = scmp.ne.s32.totalorder %s25, 1
        // Predicated region
        $region53: #{tpu_custom_call.1} parent=35 // pred_check
          %p932 = pneg %p931
        $region54: #{tpu_custom_call.1} parent=35 // pred_check_branch
          %934 = sbr.rel (%p932) target = $region56
        $region55: #{tpu_custom_call.1} parent=35 // pred_region
          %935 = vst [vmem:[#allocation3] sm:$0xff] %v930
          %936 = vst [vmem:[#allocation3 + $0x8] sm:$0xff] %v928
        $region56: #{tpu_custom_call.1} parent=35 // pred_fallthru
          _
        // Predicated region
        $region57: #{tpu_custom_call.1} parent=35 // pred_check
          %p937 = pneg %p254
        $region58: #{tpu_custom_call.1} parent=35 // pred_check_branch
          %939 = sbr.rel (%p937) target = $region60
        $region59: #{tpu_custom_call.1} parent=35 // pred_region
          %940 = vst [vmem:[#allocation10] sm:$0xff] %v930
        $region60: #{tpu_custom_call.1} parent=35 // pred_fallthru
          _
        // Predicated region
        $region61: #{tpu_custom_call.1} parent=35 // pred_check
          %p941 = pneg %p141
        $region62: #{tpu_custom_call.1} parent=35 // pred_check_branch
          %943 = sbr.rel (%p941) target = $region64
        $region63: #{tpu_custom_call.1} parent=35 // pred_region
          %s945 = ssub.s32 128, 128
          %946 = vsyncadd [#allocation6], %s945
          %s947 = smul.addr %s24, 128
          %s948 = scalar_lea.hbm %s4, %s947
          %s950 = sshll.u32 [#allocation10], 4
          %s951 = int_to_ptr.vmem [resolvable:$true] %s950
          %953 = dma.vmem_to_hbm [thread:$0]  %s951, 128, %s948, [#allocation6]
        $region64: #{tpu_custom_call.1} parent=35 // pred_fallthru
          _
        // Predicated region
        $region65: #{tpu_custom_call.1} parent=35 // pred_check
          %p954 = pneg %p141
        $region66: #{tpu_custom_call.1} parent=35 // pred_check_branch
          %956 = sbr.rel (%p954) target = $region68
        $region67: #{tpu_custom_call.1} parent=35 // pred_region
          %957 = dma.done [#allocation6], 128
        $region68: #{tpu_custom_call.1} parent=35 // pred_fallthru
          _
      $region36: #{tpu_custom_call.1} parent=5 // pred_fallthru
        _
      %p958 = scmp.le.s32.totalorder 2, %s15
      // Predicated region
      $region69: #{tpu_custom_call.1} parent=5 // pred_check
        %p959 = pneg %p958
      $region70: #{tpu_custom_call.1} parent=5 // pred_check_branch
        %961 = sbr.rel (%p959) target = $region72
      $region71: #{tpu_custom_call.1} parent=5 // pred_region
        %s962 = ssub.s32 %s15, 2
      $region72: #{tpu_custom_call.1} parent=5 // pred_fallthru
        _
    $region6: #{tpu_custom_call.1} parent=1 // loop_footer
      %s19 = sadd.s32 1, %s15
    $region7: #{tpu_custom_call.1} parent=1 // loop_footer_branch
      %14 = sbr.rel target = $region3
    $region8: #{tpu_custom_call.1} parent=1 // loop_exit
      _
    %963 = vsyncpa [#allocation5], 1
    %s964 = scalar_lea.sflag [#allocation5], 1
    %965 = vsyncpa %s964, 1
    %966 = vsyncpa [#allocation8], 1
    %967 = vsyncpa [#allocation6], 1
    %s968 = scalar_lea.sflag [#allocation6], 1
    %969 = vsyncpa %s968, 1

</llo_original>
